<compile_context>
chip_gen: v7x
topology: tpu7x:2x2x1
jax: 0.10.0
libtpu: 0.0.40
codegen_flags: <defaults>
</compile_context>

<pallas_src>
import functools

import jax
import jax.numpy as jnp
from jax.experimental import pallas as pl
from jax.experimental.pallas import tpu as pltpu

LANE = 128            # lane width: hidden dim padded to this
SUBLANE = 8           # f32 sublane granularity for batch-tile alignment
DEFAULT_TILE_B = 1024  # sweep 1024-2048; VMEM stays a few MiB even 2-buffered


def _round_up(n, m):
    return ((n + m - 1) // m) * m


# ---------------------------------------------------------------------------
# Kernel: one batch tile, all three matmuls + activations fused.
#   x_ref : (TB, S)   f32   (S = real state_dim, no padding)
#   w1_ref: (S,  HP)  f32   (HP = hidden padded to 128)
#   w2_ref: (HP, HP)  bf16
#   w3_ref: (HP, A)   bf16  (A = real action_dim, no padding)
#   bN_ref: (1, ...)  f32
#   out   : (TB, A)   f32
# Weights/biases use constant index maps -> resident in VMEM across steps.
# ---------------------------------------------------------------------------
def policy_net_kernel(x_ref, w1_ref, b1_ref, w2_ref, b2_ref, w3_ref, b3_ref,
                      out_ref):
    # fc1 + ReLU : f32 matmul (K = state_dim, tiny -> keep exact)
    h1 = jnp.dot(x_ref[...], w1_ref[...], preferred_element_type=jnp.float32)
    h1 = jnp.maximum(h1 + b1_ref[...], 0.0)

    # fc2 + ReLU : bf16 MXU operands, f32 accumulate
    h2 = jnp.dot(h1.astype(jnp.bfloat16), w2_ref[...],
                 preferred_element_type=jnp.float32)
    h2 = jnp.maximum(h2 + b2_ref[...], 0.0)

    # fc3 + tanh : narrow (action_dim) output, no lane slice needed
    h3 = jnp.dot(h2.astype(jnp.bfloat16), w3_ref[...],
                 preferred_element_type=jnp.float32)
    out_ref[...] = jnp.tanh(h3 + b3_ref[...]).astype(out_ref.dtype)


# ---------------------------------------------------------------------------
# One-time param preparation.
#   * hidden dim zero-padded to a multiple of 128 lanes (lane-dense h1/h2)
#   * w1 stays f32 (exact fc1), w2/w3 cast to bf16 for the MXU
#   * state_dim (w1 rows) and action_dim (w3 cols) stay unpadded: full-dim
#     blocks are legal and keep x / out traffic at the real payload size.
# Note (v6e/v7x): MXU is 2x256; if hidden_dim ever exceeds 128, consider
# padding to 256 there. Irrelevant while hidden <= 128 and HBM-bound.
# ---------------------------------------------------------------------------
def prepare_params(params):
    hidden_dim = params["w1"].shape[1]
    hp = _round_up(hidden_dim, LANE)
    dh = hp - hidden_dim

    w1 = jnp.pad(params["w1"], ((0, 0), (0, dh))).astype(jnp.float32)
    b1 = jnp.pad(params["b1"].reshape(1, -1), ((0, 0), (0, dh))).astype(jnp.float32)
    w2 = jnp.pad(params["w2"], ((0, dh), (0, dh))).astype(jnp.bfloat16)
    b2 = jnp.pad(params["b2"].reshape(1, -1), ((0, 0), (0, dh))).astype(jnp.float32)
    w3 = jnp.pad(params["w3"], ((0, dh), (0, 0))).astype(jnp.bfloat16)
    b3 = params["b3"].reshape(1, -1).astype(jnp.float32)
    return {"w1": w1, "b1": b1, "w2": w2, "b2": b2, "w3": w3, "b3": b3}


@functools.partial(jax.jit, static_argnames=("tile_b_max",))
def policy_net_forward(x, prepared, tile_b_max=DEFAULT_TILE_B):
    """x: (B, state_dim) f32. prepared: output of prepare_params()."""
    w1, b1 = prepared["w1"], prepared["b1"]
    w2, b2 = prepared["w2"], prepared["b2"]
    w3, b3 = prepared["w3"], prepared["b3"]

    b, s = x.shape
    hp = w1.shape[1]
    a = w3.shape[1]

    # ---- batch tiling ------------------------------------------------------
    # Bound padding waste (balanced tiles, <8 wasted rows per tile) and keep
    # >=2 grid steps whenever the batch is big enough so "parallel" can shard
    # across both TensorCores on v7x.
    n_tiles = pl.cdiv(b, tile_b_max)
    if b >= 2 * SUBLANE:
        n_tiles = max(n_tiles, 2)
    tb = _round_up(pl.cdiv(b, n_tiles), SUBLANE)
    bp = _round_up(b, tb)
    grid = (bp // tb,)

    x_pad = jnp.pad(x.astype(jnp.float32), ((0, bp - b), (0, 0))) if bp > b \
        else x.astype(jnp.float32)

    resident = lambda arr: pl.BlockSpec(arr.shape, lambda i: (0, 0))

    cost = pl.CostEstimate(
        flops=2 * bp * (s * hp + hp * hp + hp * a),
        transcendentals=bp * a,
        bytes_accessed=(bp * s * 4                      # x read (f32, unpadded lanes)
                        + w1.size * 4                    # fc1 weights f32
                        + (w2.size + w3.size) * 2        # fc2/fc3 weights bf16
                        + (b1.size + b2.size + b3.size) * 4
                        + bp * a * 4),                   # narrow f32 output
    )

    out = pl.pallas_call(
        policy_net_kernel,
        out_shape=jax.ShapeDtypeStruct((bp, a), jnp.float32),
        grid_spec=pltpu.PrefetchScalarGridSpec(
            num_scalar_prefetch=0,
            grid=grid,
            in_specs=[
                pl.BlockSpec((tb, s), lambda i: (i, 0)),   # x tile (full-dim last axis)
                resident(w1), resident(b1),
                resident(w2), resident(b2),
                resident(w3), resident(b3),
            ],
            out_specs=pl.BlockSpec((tb, a), lambda i: (i, 0)),
        ),
        compiler_params=pltpu.CompilerParams(
            dimension_semantics=("parallel",),  # shards batch tiles over 2 TCs on v7x
            vmem_limit_bytes=32 << 20,          # explicit: safe under v7x's 64 MiB
        ),
        cost_estimate=cost,
    )(x_pad, w1, b1, w2, b2, w3, b3)

    return out[:b] if bp > b else out


# ---------------------------------------------------------------------------
# Init mirroring the torch module: weights ~ N(0, 0.3); biases use torch
# Linear's default U(-1/sqrt(fan_in), 1/sqrt(fan_in)). Stored (in, out) so
# y = x @ W + b.
# ---------------------------------------------------------------------------
def init_params(key, state_dim, hidden_dim, action_dim):
    ks = jax.random.split(key, 6)

    def wt(k, fan_in, fan_out):
        return (0.3 * jax.random.normal(k, (fan_in, fan_out))).astype(jnp.float32)

    def bias(k, fan_in, fan_out):
        bound = 1.0 / jnp.sqrt(jnp.float32(fan_in))
        return jax.random.uniform(
            k, (fan_out,), minval=-bound, maxval=bound).astype(jnp.float32)

    return {
        "w1": wt(ks[0], state_dim, hidden_dim),
        "b1": bias(ks[1], state_dim, hidden_dim),
        "w2": wt(ks[2], hidden_dim, hidden_dim),
        "b2": bias(ks[3], hidden_dim, hidden_dim),
        "w3": wt(ks[4], hidden_dim, action_dim),
        "b3": bias(ks[5], hidden_dim, action_dim),
    }


def policy_net_reference(x, params):
    """Plain-JAX f32 reference."""
    h1 = jnp.maximum(x @ params["w1"] + params["b1"], 0.0)
    h2 = jnp.maximum(h1 @ params["w2"] + params["b2"], 0.0)
    return jnp.tanh(h2 @ params["w3"] + params["b3"])


if __name__ == "__main__":
    state_dim, hidden_dim, action_dim = 4, 32, 8

    key = jax.random.PRNGKey(0)
    k_params, k_x1, k_x2 = jax.random.split(key, 3)

    params = init_params(k_params, state_dim, hidden_dim, action_dim)
    prepared = prepare_params(params)

    # Small single-tile batch.
    x1 = jax.random.normal(k_x1, (2, state_dim), dtype=jnp.float32)
    out1 = jax.block_until_ready(policy_net_forward(x1, prepared))
    ref1 = policy_net_reference(x1, params)
    assert out1.shape == (2, action_dim)
    assert jnp.allclose(out1, ref1, atol=2e-2, rtol=2e-2), (
        f"max abs err {jnp.max(jnp.abs(out1 - ref1))}")

    # Batch exercising the multi-tile + ragged-batch (pad & slice) path.
    x2 = jax.random.normal(k_x2, (20, state_dim), dtype=jnp.float32)
    out2 = jax.block_until_ready(policy_net_forward(x2, prepared))
    ref2 = policy_net_reference(x2, params)
    assert out2.shape == (20, action_dim)
    assert jnp.allclose(out2, ref2, atol=2e-2, rtol=2e-2), (
        f"max abs err {jnp.max(jnp.abs(out2 - ref2))}")

    print("KERNEL_OK")
</pallas_src>

<mosaic_0001>
module attributes {stable_mosaic.version = 11 : i64} {
  func.func @policy_net_kernel(%arg0: i32, %arg1: memref<8x4xf32, #tpu.memory_space<vmem>>, %arg2: memref<4x128xf32, #tpu.memory_space<vmem>>, %arg3: memref<1x128xf32, #tpu.memory_space<vmem>>, %arg4: memref<128x128xbf16, #tpu.memory_space<vmem>>, %arg5: memref<1x128xf32, #tpu.memory_space<vmem>>, %arg6: memref<128x8xbf16, #tpu.memory_space<vmem>>, %arg7: memref<1x8xf32, #tpu.memory_space<vmem>>, %arg8: memref<8x8xf32, #tpu.memory_space<vmem>>) attributes {dimension_semantics = [#tpu.dimension_semantics<parallel>], iteration_bounds = array<i64: 1>, scalar_prefetch = 0 : i64, scratch_operands = 0 : i64, tpu.core_type = #tpu.core_type<tc>, window_params = [{transform_indices = @transform_0, window_bounds = array<i64: 8, 4>}, {pipeline_mode = #tpu.pipeline_mode<synchronous>, transform_indices = @transform_1, window_bounds = array<i64: 4, 128>}, {pipeline_mode = #tpu.pipeline_mode<synchronous>, transform_indices = @transform_2, window_bounds = array<i64: 1, 128>}, {pipeline_mode = #tpu.pipeline_mode<synchronous>, transform_indices = @transform_3, window_bounds = array<i64: 128, 128>}, {pipeline_mode = #tpu.pipeline_mode<synchronous>, transform_indices = @transform_4, window_bounds = array<i64: 1, 128>}, {pipeline_mode = #tpu.pipeline_mode<synchronous>, transform_indices = @transform_5, window_bounds = array<i64: 128, 8>}, {pipeline_mode = #tpu.pipeline_mode<synchronous>, transform_indices = @transform_6, window_bounds = array<i64: 1, 8>}, {transform_indices = @transform_7, window_bounds = array<i64: 8, 8>}]} {
    %c0 = arith.constant 0 : index
    %c0_0 = arith.constant 0 : index
    %0 = vector.load %arg1[%c0, %c0_0] : memref<8x4xf32, #tpu.memory_space<vmem>>, vector<8x4xf32>
    %c0_1 = arith.constant 0 : index
    %c0_2 = arith.constant 0 : index
    %1 = vector.load %arg2[%c0_1, %c0_2] : memref<4x128xf32, #tpu.memory_space<vmem>>, vector<4x128xf32>
    %cst = arith.constant dense<0.000000e+00> : vector<8x128xf32>
    %2 = tpu.matmul %0, %1, %cst {dimension_numbers = #tpu.dot_dimension_numbers<[1], [0], [0], [1], [0, 0, 1, 1], [], []>} : vector<8x4xf32>, vector<4x128xf32>, vector<8x128xf32> -> vector<8x128xf32>
    %c0_3 = arith.constant 0 : index
    %c0_4 = arith.constant 0 : index
    %3 = vector.load %arg3[%c0_3, %c0_4] : memref<1x128xf32, #tpu.memory_space<vmem>>, vector<1x128xf32>
    %4 = vector.broadcast %3 : vector<1x128xf32> to vector<8x128xf32>
    %5 = arith.addf %2, %4 : vector<8x128xf32>
    %cst_5 = arith.constant 0.000000e+00 : f32
    %6 = vector.broadcast %cst_5 : f32 to vector<8x128xf32>
    %7 = arith.maximumf %5, %6 : vector<8x128xf32>
    %8 = arith.truncf %7 : vector<8x128xf32> to vector<8x128xbf16>
    %c0_6 = arith.constant 0 : index
    %c0_7 = arith.constant 0 : index
    %9 = vector.load %arg4[%c0_6, %c0_7] : memref<128x128xbf16, #tpu.memory_space<vmem>>, vector<128x128xbf16>
    %cst_8 = arith.constant dense<0.000000e+00> : vector<8x128xf32>
    %10 = tpu.matmul %8, %9, %cst_8 {dimension_numbers = #tpu.dot_dimension_numbers<[1], [0], [0], [1], [0, 0, 1, 1], [], []>} : vector<8x128xbf16>, vector<128x128xbf16>, vector<8x128xf32> -> vector<8x128xf32>
    %c0_9 = arith.constant 0 : index
    %c0_10 = arith.constant 0 : index
    %11 = vector.load %arg5[%c0_9, %c0_10] : memref<1x128xf32, #tpu.memory_space<vmem>>, vector<1x128xf32>
    %12 = vector.broadcast %11 : vector<1x128xf32> to vector<8x128xf32>
    %13 = arith.addf %10, %12 : vector<8x128xf32>
    %cst_11 = arith.constant 0.000000e+00 : f32
    %14 = vector.broadcast %cst_11 : f32 to vector<8x128xf32>
    %15 = arith.maximumf %13, %14 : vector<8x128xf32>
    %16 = arith.truncf %15 : vector<8x128xf32> to vector<8x128xbf16>
    %c0_12 = arith.constant 0 : index
    %c0_13 = arith.constant 0 : index
    %17 = vector.load %arg6[%c0_12, %c0_13] : memref<128x8xbf16, #tpu.memory_space<vmem>>, vector<128x8xbf16>
    %cst_14 = arith.constant dense<0.000000e+00> : vector<8x8xf32>
    %18 = tpu.matmul %16, %17, %cst_14 {dimension_numbers = #tpu.dot_dimension_numbers<[1], [0], [0], [1], [0, 0, 1, 1], [], []>} : vector<8x128xbf16>, vector<128x8xbf16>, vector<8x8xf32> -> vector<8x8xf32>
    %c0_15 = arith.constant 0 : index
    %c0_16 = arith.constant 0 : index
    %19 = vector.load %arg7[%c0_15, %c0_16] : memref<1x8xf32, #tpu.memory_space<vmem>>, vector<1x8xf32>
    %20 = vector.broadcast %19 : vector<1x8xf32> to vector<8x8xf32>
    %21 = arith.addf %18, %20 : vector<8x8xf32>
    %22 = math.tanh %21 : vector<8x8xf32>
    %c0_17 = arith.constant 0 : index
    %c0_18 = arith.constant 0 : index
    %23 = vector.load %arg8[%c0_17, %c0_18] : memref<8x8xf32, #tpu.memory_space<vmem>>, vector<8x8xf32>
    tpu.vector_store %arg8[%c0_17, %c0_18], %22 {strides = array<i32>} : memref<8x8xf32, #tpu.memory_space<vmem>>, vector<8x8xf32>,
    return
  }
  func.func @transform_0(%arg0: i32) -> (i32, i32) {
    %c0_i32 = arith.constant 0 : i32
    %c0_i32_0 = arith.constant 0 : i32
    return %arg0, %c0_i32 : i32, i32
  }
  func.func @transform_1(%arg0: i32) -> (i32, i32) {
    %c0_i32 = arith.constant 0 : i32
    %c0_i32_0 = arith.constant 0 : i32
    %c0_i32_1 = arith.constant 0 : i32
    return %c0_i32, %c0_i32_0 : i32, i32
  }
  func.func @transform_2(%arg0: i32) -> (i32, i32) {
    %c0_i32 = arith.constant 0 : i32
    %c0_i32_0 = arith.constant 0 : i32
    %c0_i32_1 = arith.constant 0 : i32
    return %c0_i32, %c0_i32_0 : i32, i32
  }
  func.func @transform_3(%arg0: i32) -> (i32, i32) {
    %c0_i32 = arith.constant 0 : i32
    %c0_i32_0 = arith.constant 0 : i32
    %c0_i32_1 = arith.constant 0 : i32
    return %c0_i32, %c0_i32_0 : i32, i32
  }
  func.func @transform_4(%arg0: i32) -> (i32, i32) {
    %c0_i32 = arith.constant 0 : i32
    %c0_i32_0 = arith.constant 0 : i32
    %c0_i32_1 = arith.constant 0 : i32
    return %c0_i32, %c0_i32_0 : i32, i32
  }
  func.func @transform_5(%arg0: i32) -> (i32, i32) {
    %c0_i32 = arith.constant 0 : i32
    %c0_i32_0 = arith.constant 0 : i32
    %c0_i32_1 = arith.constant 0 : i32
    return %c0_i32, %c0_i32_0 : i32, i32
  }
  func.func @transform_6(%arg0: i32) -> (i32, i32) {
    %c0_i32 = arith.constant 0 : i32
    %c0_i32_0 = arith.constant 0 : i32
    %c0_i32_1 = arith.constant 0 : i32
    return %c0_i32, %c0_i32_0 : i32, i32
  }
  func.func @transform_7(%arg0: i32) -> (i32, i32) {
    %c0_i32 = arith.constant 0 : i32
    %c0_i32_0 = arith.constant 0 : i32
    return %arg0, %c0_i32 : i32, i32
  }
}

</mosaic_0001>

<llo_original>
// kernel: policy_net_forward.1
$region0: #{policy_net_forward.1}
  #allocation0 [shape = 'u32[]', space=smem, size = 0x4, offset = 0x4, fixed_abs, tag = 'smem constant byte address 0x4 - core index']
  #allocation1 [shape = 'u32[144,128]{1,0:T(1,128)}', space=vmem, size = 0x12000, scoped, tag = 'internal scratch']
  %s0 = inlined_call_operand.vmem [shape: f32[8,4], index: 0, kind: input, shape index: {}]
  %s1 = inlined_call_operand.vmem [shape: f32[4,128], index: 1, kind: input, shape index: {}]
  %s2 = inlined_call_operand.vmem [shape: f32[1,128], index: 2, kind: input, shape index: {}]
  %s3 = inlined_call_operand.vmem [shape: bf16[128,128], index: 3, kind: input, shape index: {}]
  %s4 = inlined_call_operand.vmem [shape: f32[1,128], index: 4, kind: input, shape index: {}]
  %s5 = inlined_call_operand.vmem [shape: bf16[128,8], index: 5, kind: input, shape index: {}]
  %s6 = inlined_call_operand.vmem [shape: f32[1,8], index: 6, kind: input, shape index: {}]
  %s7 = inlined_call_operand.vmem [shape: f32[8,8], index: 7, kind: output, shape index: {}]
  %s8 = sld [smem:[#allocation0]]
  $region38: #{policy_net_forward.1} parent=0
    _
  %s10 = ssub.s32 1, %s8
  %s11 = scalar_select 0, %s10, %s8
  // Predicated region
  $region2: #{policy_net_forward.1} parent=0 // pred_check
    _
  $region3: #{policy_net_forward.1} parent=0 // pred_check_branch
    %13 = sbr.rel (0) target = $region5
  $region4: #{policy_net_forward.1} parent=0 // pred_region
    _
  $region5: #{policy_net_forward.1} parent=0 // pred_fallthru
    _
  // Predicated region
  $region6: #{policy_net_forward.1} parent=0 // pred_check
    _
  $region7: #{policy_net_forward.1} parent=0 // pred_check_branch
    %15 = sbr.rel (0) target = $region9
  $region8: #{policy_net_forward.1} parent=0 // pred_region
    _
  $region9: #{policy_net_forward.1} parent=0 // pred_fallthru
    _
  // Predicated region
  $region10: #{policy_net_forward.1} parent=0 // pred_check
    _
  $region11: #{policy_net_forward.1} parent=0 // pred_check_branch
    %17 = sbr.rel (0) target = $region13
  $region12: #{policy_net_forward.1} parent=0 // pred_region
    _
  $region13: #{policy_net_forward.1} parent=0 // pred_fallthru
    _
  // Predicated region
  $region14: #{policy_net_forward.1} parent=0 // pred_check
    _
  $region15: #{policy_net_forward.1} parent=0 // pred_check_branch
    %19 = sbr.rel (0) target = $region17
  $region16: #{policy_net_forward.1} parent=0 // pred_region
    _
  $region17: #{policy_net_forward.1} parent=0 // pred_fallthru
    _
  // Predicated region
  $region18: #{policy_net_forward.1} parent=0 // pred_check
    _
  $region19: #{policy_net_forward.1} parent=0 // pred_check_branch
    %21 = sbr.rel (0) target = $region21
  $region20: #{policy_net_forward.1} parent=0 // pred_region
    _
  $region21: #{policy_net_forward.1} parent=0 // pred_fallthru
    _
  // Predicated region
  $region22: #{policy_net_forward.1} parent=0 // pred_check
    _
  $region23: #{policy_net_forward.1} parent=0 // pred_check_branch
    %23 = sbr.rel (0) target = $region25
  $region24: #{policy_net_forward.1} parent=0 // pred_region
    _
  $region25: #{policy_net_forward.1} parent=0 // pred_fallthru
    _
  // Predicated region
  $region26: #{policy_net_forward.1} parent=0 // pred_check
    _
  $region27: #{policy_net_forward.1} parent=0 // pred_check_branch
    %25 = sbr.rel (0) target = $region29
  $region28: #{policy_net_forward.1} parent=0 // pred_region
    _
  $region29: #{policy_net_forward.1} parent=0 // pred_fallthru
    _
  %v27 = vld [vmem:[%s0] sm:$0xff]
  %v28 = vld [vmem:[%s1] sm:$0xf]
  %v29 = vld [vmem:[%s2] sm:$0x1]
  %v31 = vlaneseq
  %v32 = vshrl.u32 %v31, 7
  %v33 = vsub.s32 0, %v32
  %v34 = vrot.slane %v29, %v33
  %vm36 = vcmask 31744
  %v38 = vsel %vm36, %v27, 0
  %vm40 = vcmask 1043456
  %v42 = vsel %vm40, %v28, 0
  %44 = vmatprep.subr.mxu0 0.0
  %45 = vmatpush1.msra.mxu0 %v42
  %46 = vmatprep.subr.mxu0 0.0
  %47 = vmatpush1.msra.mxu0 0.0
  %48 = vmatprep.subr.mxu0 0.0
  %49 = vmatpush1.msra.mxu0 0.0
  %50 = vmatprep.subr.mxu0 0.0
  %51 = vmatpush1.msra.mxu0 0.0
  %52 = vmatprep.subr.mxu0 0.0
  %53 = vmatpush1.msra.mxu0 0.0
  %54 = vmatprep.subr.mxu0 0.0
  %55 = vmatpush1.msra.mxu0 0.0
  %56 = vmatprep.subr.mxu0 0.0
  %57 = vmatpush1.msra.mxu0 0.0
  %58 = vmatprep.subr.mxu0 0.0
  %59 = vmatpush1.msra.mxu0 0.0
  %60 = vmatprep.subr.mxu0 0.0
  %61 = vmatpush1.msra.mxu0 0.0
  %62 = vmatprep.subr.mxu0 0.0
  %63 = vmatpush1.msra.mxu0 0.0
  %64 = vmatprep.subr.mxu0 0.0
  %65 = vmatpush1.msra.mxu0 0.0
  %66 = vmatprep.subr.mxu0 0.0
  %67 = vmatpush1.msra.mxu0 0.0
  %68 = vmatprep.subr.mxu0 0.0
  %69 = vmatpush1.msra.mxu0 0.0
  %70 = vmatprep.subr.mxu0 0.0
  %71 = vmatpush1.msra.mxu0 0.0
  %72 = vmatprep.subr.mxu0 0.0
  %73 = vmatpush1.msra.mxu0 0.0
  %74 = vmatprep.subr.mxu0 0.0
  %75 = vmatpush1.msra.mxu0 0.0
  %76 = vmatprep.subr.mxu0 0.0
  %77 = vmatpush1.msra.mxu0 0.0
  %78 = vmatprep.subr.mxu0 0.0
  %79 = vmatpush1.msra.mxu0 0.0
  %80 = vmatprep.subr.mxu0 0.0
  %81 = vmatpush1.msra.mxu0 0.0
  %82 = vmatprep.subr.mxu0 0.0
  %83 = vmatpush1.msra.mxu0 0.0
  %84 = vmatprep.subr.mxu0 0.0
  %85 = vmatpush1.msra.mxu0 0.0
  %86 = vmatprep.subr.mxu0 0.0
  %87 = vmatpush1.msra.mxu0 0.0
  %88 = vmatprep.subr.mxu0 0.0
  %89 = vmatpush1.msra.mxu0 0.0
  %90 = vmatprep.subr.mxu0 0.0
  %91 = vmatpush1.msra.mxu0 0.0
  %92 = vmatprep.subr.mxu0 0.0
  %93 = vmatpush1.msra.mxu0 0.0
  %94 = vmatprep.subr.mxu0 0.0
  %95 = vmatpush1.msra.mxu0 0.0
  %96 = vmatprep.subr.mxu0 0.0
  %97 = vmatpush1.msra.mxu0 0.0
  %98 = vmatprep.subr.mxu0 0.0
  %99 = vmatpush1.msra.mxu0 0.0
  %100 = vmatprep.subr.mxu0 0.0
  %101 = vmatpush1.msra.mxu0 0.0
  %102 = vmatprep.subr.mxu0 0.0
  %103 = vmatpush1.msra.mxu0 0.0
  %104 = vmatprep.subr.mxu0 0.0
  %105 = vmatpush1.msra.mxu0 0.0
  %106 = vmatprep.subr.mxu0 0.0
  %107 = vmatpush1.msra.mxu0 0.0
  %108 = vmatprep.mubr.f32.mxu0 0.0
  %109 = vmatmul.mubr.f32.gmra.mrb[0].mxu0 %v38
  %v110 = vpop.f32.mrb[0].mxu0
  %v111 = vadd.f32 %v34, %v110
  %v112 = vpop.f32.mrb[0].mxu0
  %113 = vdwg.mxu0
  %v114 = vmax.f32 %v111, 0.0
  %v115 = vpack.c.bf16 %v114, %v114
  %v116 = vld [vmem:[%s3] sm:$0xf]
  %v117 = vld [vmem:[%s3 + $0x4] sm:$0xf]
  %v118 = vld [vmem:[%s3 + $0x8] sm:$0xf]
  %v119 = vld [vmem:[%s3 + $0xc] sm:$0xf]
  %v120 = vld [vmem:[%s3 + $0x10] sm:$0xf]
  %v121 = vld [vmem:[%s3 + $0x14] sm:$0xf]
  %v122 = vld [vmem:[%s3 + $0x18] sm:$0xf]
  %v123 = vld [vmem:[%s3 + $0x1c] sm:$0xf]
  %v124 = vld [vmem:[%s3 + $0x20] sm:$0xf]
  %v125 = vld [vmem:[%s3 + $0x24] sm:$0xf]
  %v126 = vld [vmem:[%s3 + $0x28] sm:$0xf]
  %v127 = vld [vmem:[%s3 + $0x2c] sm:$0xf]
  %v128 = vld [vmem:[%s3 + $0x30] sm:$0xf]
  %v129 = vld [vmem:[%s3 + $0x34] sm:$0xf]
  %v130 = vld [vmem:[%s3 + $0x38] sm:$0xf]
  %v131 = vld [vmem:[%s3 + $0x3c] sm:$0xf]
  %v132 = vld [vmem:[%s4] sm:$0x1]
  %v134 = vlaneseq
  %v135 = vshrl.u32 %v134, 7
  %v136 = vsub.s32 0, %v135
  %v137 = vrot.slane %v132, %v136
  %v155 = vunpack.c.l.b16 %v116
  %v156 = vunpack.c.l.b16 %v117
  %v157 = vunpack.c.l.b16 %v118
  %v158 = vunpack.c.l.b16 %v119
  %v159 = vunpack.c.l.b16 %v120
  %v160 = vunpack.c.l.b16 %v121
  %v161 = vunpack.c.l.b16 %v122
  %v162 = vunpack.c.l.b16 %v123
  %v163 = vunpack.c.l.b16 %v124
  %v164 = vunpack.c.l.b16 %v125
  %v165 = vunpack.c.l.b16 %v126
  %v166 = vunpack.c.l.b16 %v127
  %v167 = vunpack.c.l.b16 %v128
  %v168 = vunpack.c.l.b16 %v129
  %v169 = vunpack.c.l.b16 %v130
  %v170 = vunpack.c.l.b16 %v131
  %v171 = vpack.c.b16 %v156, %v155
  %v172 = vpack.c.b16 %v158, %v157
  %v173 = vpack.c.b16 %v160, %v159
  %v174 = vpack.c.b16 %v162, %v161
  %v175 = vpack.c.b16 %v164, %v163
  %v176 = vpack.c.b16 %v166, %v165
  %v177 = vpack.c.b16 %v168, %v167
  %v178 = vpack.c.b16 %v170, %v169
  %187 = vmatprep.subr.bf16.mxu0 0
  %188 = vmatpush1.bf16.msra.mxu0 %v171
  %189 = vmatprep.subr.bf16.mxu0 0
  %190 = vmatpush1.bf16.msra.mxu0 %v172
  %191 = vmatprep.subr.bf16.mxu0 0
  %192 = vmatpush1.bf16.msra.mxu0 %v173
  %193 = vmatprep.subr.bf16.mxu0 0
  %194 = vmatpush1.bf16.msra.mxu0 %v174
  %195 = vmatprep.subr.bf16.mxu0 0
  %196 = vmatpush1.bf16.msra.mxu0 %v175
  %197 = vmatprep.subr.bf16.mxu0 0
  %198 = vmatpush1.bf16.msra.mxu0 %v176
  %199 = vmatprep.subr.bf16.mxu0 0
  %200 = vmatpush1.bf16.msra.mxu0 %v177
  %201 = vmatprep.subr.bf16.mxu0 0
  %202 = vmatpush1.bf16.msra.mxu0 %v178
  %203 = vmatprep.subr.bf16.mxu0 0
  %204 = vmatpush1.bf16.msra.mxu0 0
  %205 = vmatprep.subr.bf16.mxu0 0
  %206 = vmatpush1.bf16.msra.mxu0 0
  %207 = vmatprep.subr.bf16.mxu0 0
  %208 = vmatpush1.bf16.msra.mxu0 0
  %209 = vmatprep.subr.bf16.mxu0 0
  %210 = vmatpush1.bf16.msra.mxu0 0
  %211 = vmatprep.subr.bf16.mxu0 0
  %212 = vmatpush1.bf16.msra.mxu0 0
  %213 = vmatprep.subr.bf16.mxu0 0
  %214 = vmatpush1.bf16.msra.mxu0 0
  %215 = vmatprep.subr.bf16.mxu0 0
  %216 = vmatpush1.bf16.msra.mxu0 0
  %217 = vmatprep.subr.bf16.mxu0 0
  %218 = vmatpush1.bf16.msra.mxu0 0
  %219 = vmatprep.mubr.bf16.mxu0 0
  %220 = vmatmul.mubr.bf16.gmra.mrb[0].mxu0 %v115
  %v221 = vpop.f32.mrb[0].mxu0
  %v222 = vadd.f32 %v137, %v221
  %v223 = vpop.f32.mrb[0].mxu0
  %v224 = vpop.f32.mrb[0].mxu0
  %v225 = vpop.f32.mrb[0].mxu0
  %226 = vdwg.mxu0
  %v227 = vmax.f32 %v222, 0.0
  %v228 = vpack.c.bf16 %v227, %v227
  %v229 = vld [vmem:[%s5] sm:$0xf]
  %v230 = vld [vmem:[%s5 + $0x4] sm:$0xf]
  %v231 = vld [vmem:[%s5 + $0x8] sm:$0xf]
  %v232 = vld [vmem:[%s5 + $0xc] sm:$0xf]
  %v233 = vld [vmem:[%s5 + $0x10] sm:$0xf]
  %v234 = vld [vmem:[%s5 + $0x14] sm:$0xf]
  %v235 = vld [vmem:[%s5 + $0x18] sm:$0xf]
  %v236 = vld [vmem:[%s5 + $0x1c] sm:$0xf]
  %v237 = vld [vmem:[%s5 + $0x20] sm:$0xf]
  %v238 = vld [vmem:[%s5 + $0x24] sm:$0xf]
  %v239 = vld [vmem:[%s5 + $0x28] sm:$0xf]
  %v240 = vld [vmem:[%s5 + $0x2c] sm:$0xf]
  %v241 = vld [vmem:[%s5 + $0x30] sm:$0xf]
  %v242 = vld [vmem:[%s5 + $0x34] sm:$0xf]
  %v243 = vld [vmem:[%s5 + $0x38] sm:$0xf]
  %v244 = vld [vmem:[%s5 + $0x3c] sm:$0xf]
  %v245 = vld [vmem:[%s6] sm:$0x1]
  %v247 = vlaneseq
  %v248 = vshrl.u32 %v247, 7
  %v249 = vsub.s32 0, %v248
  %v250 = vrot.slane %v245, %v249
  %v268 = vunpack.c.l.b16 %v229
  %v269 = vunpack.c.l.b16 %v230
  %v270 = vunpack.c.l.b16 %v231
  %v271 = vunpack.c.l.b16 %v232
  %v272 = vunpack.c.l.b16 %v233
  %v273 = vunpack.c.l.b16 %v234
  %v274 = vunpack.c.l.b16 %v235
  %v275 = vunpack.c.l.b16 %v236
  %v276 = vunpack.c.l.b16 %v237
  %v277 = vunpack.c.l.b16 %v238
  %v278 = vunpack.c.l.b16 %v239
  %v279 = vunpack.c.l.b16 %v240
  %v280 = vunpack.c.l.b16 %v241
  %v281 = vunpack.c.l.b16 %v242
  %v282 = vunpack.c.l.b16 %v243
  %v283 = vunpack.c.l.b16 %v244
  %v284 = vpack.c.b16 %v269, %v268
  %v285 = vpack.c.b16 %v271, %v270
  %v286 = vpack.c.b16 %v273, %v272
  %v287 = vpack.c.b16 %v275, %v274
  %v288 = vpack.c.b16 %v277, %v276
  %v289 = vpack.c.b16 %v279, %v278
  %v290 = vpack.c.b16 %v281, %v280
  %v291 = vpack.c.b16 %v283, %v282
  %300 = vmatprep.subr.bf16.mxu0 0
  %301 = vmatpush1.bf16.msra.mxu0 %v284
  %302 = vmatprep.subr.bf16.mxu0 0
  %303 = vmatpush1.bf16.msra.mxu0 %v285
  %304 = vmatprep.subr.bf16.mxu0 0
  %305 = vmatpush1.bf16.msra.mxu0 %v286
  %306 = vmatprep.subr.bf16.mxu0 0
  %307 = vmatpush1.bf16.msra.mxu0 %v287
  %308 = vmatprep.subr.bf16.mxu0 0
  %309 = vmatpush1.bf16.msra.mxu0 %v288
  %310 = vmatprep.subr.bf16.mxu0 0
  %311 = vmatpush1.bf16.msra.mxu0 %v289
  %312 = vmatprep.subr.bf16.mxu0 0
  %313 = vmatpush1.bf16.msra.mxu0 %v290
  %314 = vmatprep.subr.bf16.mxu0 0
  %315 = vmatpush1.bf16.msra.mxu0 %v291
  %316 = vmatprep.subr.bf16.mxu0 0
  %317 = vmatpush1.bf16.msra.mxu0 0
  %318 = vmatprep.subr.bf16.mxu0 0
  %319 = vmatpush1.bf16.msra.mxu0 0
  %320 = vmatprep.subr.bf16.mxu0 0
  %321 = vmatpush1.bf16.msra.mxu0 0
  %322 = vmatprep.subr.bf16.mxu0 0
  %323 = vmatpush1.bf16.msra.mxu0 0
  %324 = vmatprep.subr.bf16.mxu0 0
  %325 = vmatpush1.bf16.msra.mxu0 0
  %326 = vmatprep.subr.bf16.mxu0 0
  %327 = vmatpush1.bf16.msra.mxu0 0
  %328 = vmatprep.subr.bf16.mxu0 0
  %329 = vmatpush1.bf16.msra.mxu0 0
  %330 = vmatprep.subr.bf16.mxu0 0
  %331 = vmatpush1.bf16.msra.mxu0 0
  %332 = vmatprep.mubr.bf16.mxu0 0
  %333 = vmatmul.mubr.bf16.gmra.mrb[0].mxu0 %v228
  %v334 = vpop.f32.mrb[0].mxu0
  %v335 = vadd.f32 %v250, %v334
  %v336 = vpop.f32.mrb[0].mxu0
  %v337 = vpop.f32.mrb[0].mxu0
  %v338 = vpop.f32.mrb[0].mxu0
  %339 = vdwg.mxu0
  %v340 = vtanh.pop %v335
  %vm341 = vcmask 64512
  %342 = vst.msk [vmem:[%s7] sm:$0xff] %vm341, %v340
  // Predicated region
  $region30: #{policy_net_forward.1} parent=0 // pred_check
    _
  $region31: #{policy_net_forward.1} parent=0 // pred_check_branch
    %344 = sbr.rel (0) target = $region33
  $region32: #{policy_net_forward.1} parent=0 // pred_region
    _
  $region33: #{policy_net_forward.1} parent=0 // pred_fallthru
    _
  // Predicated region
  $region34: #{policy_net_forward.1} parent=0 // pred_check
    _
  $region35: #{policy_net_forward.1} parent=0 // pred_check_branch
    %346 = sbr.rel (0) target = $region37
  $region36: #{policy_net_forward.1} parent=0 // pred_region
    _
  $region37: #{policy_net_forward.1} parent=0 // pred_fallthru
    _

</llo_original>
